<compile_context>
chip_gen: v5e
topology: v5e:2x2
jax: 0.10.0
libtpu: 0.0.40
codegen_flags: <defaults>
</compile_context>

<pallas_src>
import jax
import jax.numpy as jnp
from jax.experimental import pallas as pl
from jax.experimental.pallas import tpu as pltpu

EPS = 1e-10


def _l2norm_kernel(x_ref, w_ref, o_ref):
    # x_ref / o_ref: (C, tp) -- channels on sublanes, pixels on lanes
    # w_ref:         (C, 1)  -- per-channel scale, broadcast across pixels
    x = x_ref[...]
    xf = x.astype(jnp.float32)

    # Per-pixel L2 norm: always accumulate the squared sum in f32.
    sq_sum = jnp.sum(xf * xf, axis=0, keepdims=True)          # (1, tp) f32
    norm = jnp.sqrt(sq_sum) + EPS

    # EUP reciprocal seed (otherwise-idle slot) + one Newton-Raphson
    # refinement so the result stays ~f32-exact.  The tensor is only (1, tp),
    # so the extra VALU work is negligible.
    inv = pl.reciprocal(norm, approx=True)
    inv = inv * (2.0 - norm * inv)

    w = w_ref[...]                                            # (C, 1) f32
    if x.dtype == jnp.float32:
        o_ref[...] = (xf * inv * w).astype(o_ref.dtype)
    else:
        # Sub-f32 inputs (e.g. bf16): keep the dominant (C, tp) elementwise
        # multiplies in the native dtype -- halves vreg pressure / VALU
        # traffic on v6e/v7x (bf16 VALU); the reduction above is still f32.
        o_ref[...] = (x * inv.astype(x.dtype) * w.astype(x.dtype)).astype(o_ref.dtype)


def _round_up(v, m):
    return ((v + m - 1) // m) * m


def _generation_budget():
    """(per-buffer block-byte target, scoped-VMEM limit), sized per TPU gen."""
    vmem_cap = 0
    try:
        info = pltpu.get_tpu_info()
        for attr in ("vmem_capacity_bytes", "vmem_size_bytes", "vmem_bytes"):
            v = getattr(info, attr, None)
            if isinstance(v, int) and v > 0:
                vmem_cap = v
                break
    except Exception:
        vmem_cap = 0
    if vmem_cap > 64 * 1024 * 1024:
        # v5e / v6e class: 128 MiB physical VMEM -> take bigger tiles.
        # Working set = 2 in-bufs + 2 out-bufs = 4 * 16 MiB = 64 MiB <= 80 MiB.
        return 16 * 1024 * 1024, 80 * 1024 * 1024
    # v7x class (64 MiB per TensorCore) or unknown -> conservative sizing
    # that is valid on every generation: 4 * 8 MiB = 32 MiB <= 48 MiB.
    return 8 * 1024 * 1024, 48 * 1024 * 1024


def _pick_pixel_tile(P, C, itemsize, N, target_block_bytes):
    """Pixels per block: capped by bytes (no lane cap), multiple of 128 lanes."""
    # Sublane padding of the (C, tp) VMEM tile: 8 rows for 4-byte dtypes,
    # 16 for 2-byte, 32 for 1-byte.  Budget with the padded row count so the
    # double-buffered working set honestly fits the scoped-VMEM limit.
    sublanes = {4: 8, 2: 16, 1: 32}.get(itemsize, 8)
    c_pad = _round_up(C, sublanes)
    # NOTE (small-C guard): for C < `sublanes` the padding wastes up to 2-4x of
    # VMEM capacity and vld/vst bandwidth (HBM traffic is unaffected).  Real
    # s3fd L2Norm layers use C=256/512, so we only document it; folding pixels
    # into the sublane axis would need in-kernel reshapes across tile bounds.
    tp = target_block_bytes // max(1, c_pad * itemsize)
    tp = max(128, (tp // 128) * 128)        # lane-dense stores: multiple of 128
    if tp >= P:
        # Whole pixel extent fits in one block.
        if N == 1 and P > 128:
            # Guarantee >=2 grid blocks so megacore sharding can use both v7x
            # TensorCores for this bandwidth-bound kernel at batch 1.
            half = _round_up((P + 1) // 2, 128)
            if half < P:
                return half
        return P
    return tp


def l2norm(x_nchw, weight):
    """x_nchw: (N, C, H, W), weight: (C,) -> (N, C, H, W)."""
    N, C, H, W = x_nchw.shape
    P = H * W

    x3d = x_nchw.reshape(N, C, P)                   # free: NCHW is contiguous
    w2d = weight.reshape(C, 1).astype(jnp.float32)

    itemsize = jnp.dtype(x_nchw.dtype).itemsize
    target_block_bytes, vmem_limit = _generation_budget()
    tp = _pick_pixel_tile(P, C, itemsize, N, target_block_bytes)
    grid = (N, pl.cdiv(P, tp))  # ragged last pixel block is fine: padded lanes
                                # compute garbage but are masked on store.

    out3d = pl.pallas_call(
        _l2norm_kernel,
        out_shape=jax.ShapeDtypeStruct((N, C, P), x_nchw.dtype),
        grid_spec=pltpu.PrefetchScalarGridSpec(
            num_scalar_prefetch=0,
            grid=grid,
            in_specs=[
                # Leading batch dim squeezed -> kernel sees clean 2-D (C, tp).
                pl.BlockSpec((pl.Squeezed(), C, tp), lambda n, p: (n, 0, p)),
                pl.BlockSpec((C, 1), lambda n, p: (0, 0)),
            ],
            out_specs=pl.BlockSpec((pl.Squeezed(), C, tp), lambda n, p: (n, 0, p)),
            # NOTE: if xprof still shows exposed DMA on v7x at this tile size,
            # sweep pipeline_mode=pl.Buffered(3) on the x/out specs (budget one
            # extra block of VMEM inside the limit below).
        ),
        compiler_params=pltpu.CompilerParams(
            # Both grid axes are independent -> megacore sharding on v7x.
            dimension_semantics=("parallel", "parallel"),
            vmem_limit_bytes=vmem_limit,
        ),
    )(x3d, w2d)

    return out3d.reshape(N, C, H, W)


def l2norm_reference(x_nchw, weight):
    x32 = x_nchw.astype(jnp.float32)
    norm = jnp.sqrt(jnp.sum(x32 * x32, axis=1, keepdims=True)) + EPS
    out = x32 / norm * weight.reshape(1, -1, 1, 1).astype(jnp.float32)
    return out.astype(x_nchw.dtype)


if __name__ == "__main__":
    key = jax.random.PRNGKey(0)
    N, C, H, W = 2, 4, 16, 16
    scale = 2.0  # L2Norm(n_channels=C, scale=2.0): weight init = scale

    x = jax.random.normal(key, (N, C, H, W), dtype=jnp.float32)
    weight = jnp.full((C,), scale, dtype=jnp.float32)  # deterministic init

    out = l2norm(x, weight)
    out = jax.block_until_ready(out)

    ref = l2norm_reference(x, weight)
    assert out.shape == (N, C, H, W)
    # Tolerance leaves headroom for the EUP-seeded (NR-refined) reciprocal.
    assert jnp.allclose(out, ref, atol=1e-4, rtol=1e-4), "mismatch vs reference"

    print("KERNEL_OK")
</pallas_src>

<mosaic_0001>
module attributes {stable_mosaic.version = 11 : i64} {
  func.func @_l2norm_kernel(%arg0: i32, %arg1: i32, %arg2: memref<1x4x256xf32, #tpu.memory_space<vmem>>, %arg3: memref<4x1xf32, #tpu.memory_space<vmem>>, %arg4: memref<1x4x256xf32, #tpu.memory_space<vmem>>) attributes {dimension_semantics = [#tpu.dimension_semantics<parallel>, #tpu.dimension_semantics<parallel>], iteration_bounds = array<i64: 2, 1>, scalar_prefetch = 0 : i64, scratch_operands = 0 : i64, tpu.core_type = #tpu.core_type<tc>, window_params = [{transform_indices = @transform_0, window_bounds = array<i64: 1, 4, 256>}, {pipeline_mode = #tpu.pipeline_mode<synchronous>, transform_indices = @transform_1, window_bounds = array<i64: 4, 1>}, {transform_indices = @transform_2, window_bounds = array<i64: 1, 4, 256>}]} {
    %c0 = arith.constant 0 : index
    %c0_0 = arith.constant 0 : index
    %c0_1 = arith.constant 0 : index
    %0 = vector.load %arg2[%c0, %c0_0, %c0_1] : memref<1x4x256xf32, #tpu.memory_space<vmem>>, vector<1x4x256xf32>
    %1 = vector.shape_cast %0 : vector<1x4x256xf32> to vector<4x256xf32>
    %2 = arith.mulf %1, %1 : vector<4x256xf32>
    %cst = arith.constant dense<0.000000e+00> : vector<256xf32>
    %3 = vector.multi_reduction <add>, %2, %cst [0] : vector<4x256xf32> to vector<256xf32>
    %4 = vector.shape_cast %3 : vector<256xf32> to vector<1x256xf32>
    %5 = math.sqrt %4 : vector<1x256xf32>
    %cst_2 = arith.constant 1.000000e-10 : f32
    %6 = vector.broadcast %cst_2 : f32 to vector<1x256xf32>
    %7 = arith.addf %5, %6 : vector<1x256xf32>
    %8 = tpu.reciprocal %7 {approx = true} : vector<1x256xf32> -> vector<1x256xf32>
    %9 = arith.mulf %7, %8 : vector<1x256xf32>
    %cst_3 = arith.constant 2.000000e+00 : f32
    %10 = vector.broadcast %cst_3 : f32 to vector<1x256xf32>
    %11 = arith.subf %10, %9 : vector<1x256xf32>
    %12 = arith.mulf %8, %11 : vector<1x256xf32>
    %c0_4 = arith.constant 0 : index
    %c0_5 = arith.constant 0 : index
    %13 = vector.load %arg3[%c0_4, %c0_5] : memref<4x1xf32, #tpu.memory_space<vmem>>, vector<4x1xf32>
    %14 = vector.broadcast %12 : vector<1x256xf32> to vector<4x256xf32>
    %15 = arith.mulf %1, %14 : vector<4x256xf32>
    %16 = vector.broadcast %13 : vector<4x1xf32> to vector<4x256xf32>
    %17 = arith.mulf %15, %16 : vector<4x256xf32>
    %c0_6 = arith.constant 0 : index
    %c0_7 = arith.constant 0 : index
    %c0_8 = arith.constant 0 : index
    %18 = vector.load %arg4[%c0_6, %c0_7, %c0_8] : memref<1x4x256xf32, #tpu.memory_space<vmem>>, vector<1x4x256xf32>
    %19 = vector.shape_cast %18 : vector<1x4x256xf32> to vector<4x256xf32>
    %20 = vector.shape_cast %17 : vector<4x256xf32> to vector<1x4x256xf32>
    tpu.vector_store %arg4[%c0_6, %c0_7, %c0_8], %20 {strides = array<i32>} : memref<1x4x256xf32, #tpu.memory_space<vmem>>, vector<1x4x256xf32>,
    return
  }
  func.func @transform_0(%arg0: i32, %arg1: i32) -> (i32, i32, i32) {
    %c0_i32 = arith.constant 0 : i32
    %c0_i32_0 = arith.constant 0 : i32
    return %arg0, %c0_i32, %arg1 : i32, i32, i32
  }
  func.func @transform_1(%arg0: i32, %arg1: i32) -> (i32, i32) {
    %c0_i32 = arith.constant 0 : i32
    %c0_i32_0 = arith.constant 0 : i32
    %c0_i32_1 = arith.constant 0 : i32
    return %c0_i32, %c0_i32_0 : i32, i32
  }
  func.func @transform_2(%arg0: i32, %arg1: i32) -> (i32, i32, i32) {
    %c0_i32 = arith.constant 0 : i32
    %c0_i32_0 = arith.constant 0 : i32
    return %arg0, %c0_i32, %arg1 : i32, i32, i32
  }
}

</mosaic_0001>

<llo_original>
// kernel: tpu_custom_call.1
$region0: #{tpu_custom_call.1}
  #allocation0 [shape = 'u32[]', space=smem, size = 0x4, offset = 0x4, fixed_abs, tag = 'smem constant byte address 0x4 - core index']
  #allocation1 [shape = 'u32[72,128]{1,0:T(1,128)}', space=vmem, size = 0x9000, scoped, tag = 'internal scratch']
  %s0 = inlined_call_operand.hbm [shape: f32[2,4,256], index: 0, kind: input, shape index: {}]
  %s1 = inlined_call_operand.vmem [shape: f32[4,1], index: 1, kind: input, shape index: {}]
  %s2 = inlined_call_operand.hbm [shape: f32[2,4,256], index: 2, kind: output, shape index: {}]
  %s3 = sld [smem:[#allocation0]]
  $region45: #{tpu_custom_call.1} parent=0
    _
  %s5 = ssub.s32 1, %s3
  %s6 = scalar_select 0, %s5, %s3
  $region1: #{tpu_custom_call.1} parent=0
    #allocation2 [shape = 'u8[8192]{0}', space=vmem, size = 0x2000, scoped, tag = 'input window, operand 0']
    #allocation3 [shape = 's32[2]{0}', space=sflag, size = 0x8, scoped, tag = 'scoped memory for tpu_custom_call.1']
    #allocation4 [shape = 's32[2]{0}', space=sflag, size = 0x8, scoped, tag = 'scoped memory for tpu_custom_call.1']
    #allocation5 [shape = 'u8[8192]{0}', space=vmem, size = 0x2000, scoped, tag = 'output window, operand 0']
    %7 = vsyncpa [#allocation3], 0
    %s8 = scalar_lea.sflag [#allocation3], 1
    %9 = vsyncpa %s8, 0
    %10 = vsyncpa [#allocation4], 0
    %s11 = scalar_lea.sflag [#allocation4], 1
    %12 = vsyncpa %s11, 0
    loop: start=0, step=1, limit=4
    $region2: #{tpu_custom_call.1} parent=1 // loop_pre_header
      _
    $region3: #{tpu_custom_call.1} parent=1 // loop_header
      %s14 = sphi 0, %s18
      %p15 = scmp.ge.s32.totalorder %s14, 4
      %s21 = sphi 0, %s33
      %s22 = sphi 0, %s29
      %s23 = sphi 0, %s21
      %s24 = sphi 0, %s22
      %s25 = sphi 0, %s23
      %s26 = sphi 0, %s24
      %s38 = sphi 0, %s40
      %s41 = sphi 0, %s38
      %s42 = sphi 0, %s41
      %s58 = sphi 0, %s42
      %s62 = sphi 0, %s62
      %s64 = sphi 0, %s62
      %s65 = sphi 0, %s64
      %s79 = sphi 0, %s65
      %s87 = sphi 0, %s89
      %s90 = sphi 0, %s87
      %s91 = sphi 0, %s90
      %s107 = sphi 0, %s91
    $region4: #{tpu_custom_call.1} parent=1 // loop_header_branch
      %17 = sbr.rel (%p15) target = $region8
    $region5: #{tpu_custom_call.1} parent=1 // loop_body
      %s19 = ssub.s32 %s14, 1
      %s20 = ssub.s32 %s14, 2
      %s27 = sadd.s32 1, %s22
      %p28 = scmp.ge.s32.totalorder %s27, 1
      %s29 = scalar_select %p28, 0, %s27
      %s30 = sadd.s32 1, %s21
      %s31 = scalar_select %p28, %s30, %s21
      %p32 = scmp.ge.s32.totalorder %s31, 2
      %s33 = scalar_select %p32, 0, %s31
      %s34 = ssub.s32 %s21, %s33
      %s35 = ssub.s32 %s22, %s29
      %s36 = sor.u32 %s34, %s35
      %p37 = scmp.eq.s32.totalorder %s36, 0
      %s39 = sadd.s32 %s38, 1
      %s40 = scalar_select %p37, %s38, %s39
      %p43 = pneg %p37
      %p44 = scmp.eq.s32.totalorder %s14, 1
      %p45 = por %p43, %p44
      %p46 = scmp.ne.s32.totalorder %s38, %s41
      %p47 = scmp.eq.s32.totalorder %s14, 0
      %p48 = por %p46, %p47
      %p49 = scmp.ne.s32.totalorder %s38, %s41
      %p50 = scmp.eq.s32.totalorder %s19, 1
      %p51 = por %p49, %p50
      %p52 = scmp.ne.s32.totalorder %s41, %s42
      %p53 = scmp.eq.s32.totalorder %s19, 0
      %p54 = por %p52, %p53
      %p55 = scmp.ne.s32.totalorder %s41, %s42
      %p56 = scmp.eq.s32.totalorder %s20, 1
      %p57 = por %p55, %p56
      %p59 = scmp.ne.s32.totalorder %s42, %s58
      %p60 = scmp.eq.s32.totalorder %s20, 0
      %p61 = por %p59, %p60
      %s63 = sadd.s32 %s62, 1
      %p66 = scmp.eq.s32.totalorder %s14, 1
      %p67 = scmp.ne.s32.totalorder %s62, %s64
      %p68 = scmp.eq.s32.totalorder %s14, 0
      %p69 = por %p67, %p68
      %p70 = scmp.ne.s32.totalorder %s62, %s64
      %p71 = scmp.eq.s32.totalorder %s19, 1
      %p72 = por %p70, %p71
      %p73 = scmp.ne.s32.totalorder %s64, %s65
      %p74 = scmp.eq.s32.totalorder %s19, 0
      %p75 = por %p73, %p74
      %p76 = scmp.ne.s32.totalorder %s64, %s65
      %p77 = scmp.eq.s32.totalorder %s20, 1
      %p78 = por %p76, %p77
      %p80 = scmp.ne.s32.totalorder %s65, %s79
      %p81 = scmp.eq.s32.totalorder %s20, 0
      %p82 = por %p80, %p81
      %s83 = ssub.s32 %s21, %s33
      %s84 = ssub.s32 %s22, %s29
      %s85 = sor.u32 %s83, %s84
      %p86 = scmp.eq.s32.totalorder %s85, 0
      %s88 = sadd.s32 %s87, 1
      %s89 = scalar_select %p86, %s87, %s88
      %p92 = pneg %p86
      %p93 = scmp.eq.s32.totalorder %s14, 1
      %p94 = por %p92, %p93
      %p95 = scmp.ne.s32.totalorder %s87, %s90
      %p96 = scmp.eq.s32.totalorder %s14, 0
      %p97 = por %p95, %p96
      %p98 = scmp.ne.s32.totalorder %s87, %s90
      %p99 = scmp.eq.s32.totalorder %s19, 1
      %p100 = por %p98, %p99
      %p101 = scmp.ne.s32.totalorder %s90, %s91
      %p102 = scmp.eq.s32.totalorder %s19, 0
      %p103 = por %p101, %p102
      %p104 = scmp.ne.s32.totalorder %s90, %s91
      %p105 = scmp.eq.s32.totalorder %s20, 1
      %p106 = por %p104, %p105
      %p108 = scmp.ne.s32.totalorder %s91, %s107
      %p109 = scmp.eq.s32.totalorder %s20, 0
      %p110 = por %p108, %p109
      %p111 = scmp.le.s32.totalorder 1, %s14
      %p112 = scmp.lt.s32.totalorder %s14, 3
      %p113 = pnand %p111, %p112
      %p114 = pneg %p113
      // Predicated region
      $region9: #{tpu_custom_call.1} parent=5 // pred_check
        _
      $region10: #{tpu_custom_call.1} parent=5 // pred_check_branch
        %116 = sbr.rel (%p113) target = $region12
      $region11: #{tpu_custom_call.1} parent=5 // pred_region
        %s117 = ssub.s32 %s14, 1
        // Predicated region
        $region13: #{tpu_custom_call.1} parent=11 // pred_check
          %p118 = pneg %p75
        $region14: #{tpu_custom_call.1} parent=11 // pred_check_branch
          %120 = sbr.rel (%p118) target = $region16
        $region15: #{tpu_custom_call.1} parent=11 // pred_region
          _
        $region16: #{tpu_custom_call.1} parent=11 // pred_fallthru
          _
      $region12: #{tpu_custom_call.1} parent=5 // pred_fallthru
        _
      %p121 = scmp.lt.s32.totalorder %s14, 2
      // Predicated region
      $region17: #{tpu_custom_call.1} parent=5 // pred_check
        %p122 = pneg %p121
      $region18: #{tpu_custom_call.1} parent=5 // pred_check_branch
        %124 = sbr.rel (%p122) target = $region20
      $region19: #{tpu_custom_call.1} parent=5 // pred_region
        // Predicated region
        $region21: #{tpu_custom_call.1} parent=19 // pred_check
          %p125 = pneg %p48
        $region22: #{tpu_custom_call.1} parent=19 // pred_check_branch
          %127 = sbr.rel (%p125) target = $region24
        $region23: #{tpu_custom_call.1} parent=19 // pred_region
          %s128 = sand.u32 %s38, 1
          %s129 = scalar_lea.sflag [#allocation3], %s128
          %s130 = sand.u32 %s38, 1
          %s131 = smul.addr %s130, 8
          %s132 = scalar_lea.vmem [#allocation2], %s131
          %s133 = smul.u32 2, %s22
          %135 = vsyncadd %s129, 0
          %s136 = smul.addr %s21, 2
          %s137 = sadd.s32 %s133, %s136
          %s138 = smul.addr %s137, 4
          %s139 = scalar_lea.hbm %s0, %s138
          %s141 = sshll.u32 %s139, 4
          %s142 = int_to_ptr.hbm [resolvable:$true] %s141
          %s143 = sshll.u32 %s132, 4
          %s144 = int_to_ptr.vmem [resolvable:$true] %s143
          %146 = dma.hbm_to_vmem [thread:$0]  %s142, 128, %s144, %s129
        $region24: #{tpu_custom_call.1} parent=19 // pred_fallthru
          _
      $region20: #{tpu_custom_call.1} parent=5 // pred_fallthru
        _
      %p147 = scmp.le.s32.totalorder 1, %s14
      %p148 = scmp.lt.s32.totalorder %s14, 3
      %p149 = pnand %p147, %p148
      %p150 = pneg %p149
      // Predicated region
      $region25: #{tpu_custom_call.1} parent=5 // pred_check
        _
      $region26: #{tpu_custom_call.1} parent=5 // pred_check_branch
        %152 = sbr.rel (%p149) target = $region28
      $region27: #{tpu_custom_call.1} parent=5 // pred_region
        %s153 = ssub.s32 %s14, 1
        %s154 = sand.u32 %s41, 1
        %s155 = scalar_lea.sflag [#allocation3], %s154
        %s156 = sand.u32 %s41, 1
        %s157 = smul.addr %s156, 8
        %s158 = scalar_lea.vmem [#allocation2], %s157
        // Predicated region
        $region29: #{tpu_custom_call.1} parent=27 // pred_check
          %p159 = pneg %p54
        $region30: #{tpu_custom_call.1} parent=27 // pred_check_branch
          %161 = sbr.rel (%p159) target = $region32
        $region31: #{tpu_custom_call.1} parent=27 // pred_region
          %163 = dma.done %s155, 128
        $region32: #{tpu_custom_call.1} parent=27 // pred_fallthru
          _
        %s164 = sand.u32 %s41, 1
        %s165 = scalar_lea.sflag [#allocation3], %s164
        %s166 = sand.u32 %s41, 1
        %s167 = smul.addr %s166, 8
        %s168 = scalar_lea.vmem [#allocation2], %s167
        %p169 = pneg %p54
        %p170 = pneg %p51
        %p171 = pneg %p75
        %p172 = pneg %p72
        %p173 = pneg %p103
        %p174 = pneg %p100
        %s175 = sand.u32 %s90, 1
        %s176 = scalar_lea.sflag [#allocation4], %s175
        %s177 = sand.u32 %s90, 1
        %s178 = smul.addr %s177, 8
        %s179 = scalar_lea.vmem [#allocation5], %s178
        %s180 = smul.u32 2, %s24
        %s181 = smul.u32 2, %s24
        %v182 = vld [vmem:[%s158] sm:$0xff]
        %v183 = vmul.f32 %v182, %v182
        %185 = vst [vmem:[#allocation1] ss:$2 sm:$0xff] %v183
        %v186 = vld.sshfl [vmem:[#allocation1] sm:$0xff pattern:$0x75316420]
        %v187 = vld.sshfl [vmem:[#allocation1 + $0x8] sm:$0xff pattern:$0x75316420]
        %vm190 = vcmask 1043456
        %v191 = vsel %vm190, %v186, 0.0
        %v192 = vrot.slane %v191, 4
        %v193 = vadd.f32 %v191, %v192
        %v194 = vrot.slane %v193, 2
        %v195 = vadd.f32 %v193, %v194
        %v196 = vrot.slane %v195, 1
        %v197 = vadd.f32 %v195, %v196
        %v198 = vsel %vm190, %v187, 0.0
        %v199 = vrot.slane %v198, 4
        %v200 = vadd.f32 %v198, %v199
        %v201 = vrot.slane %v200, 2
        %v202 = vadd.f32 %v200, %v201
        %v203 = vrot.slane %v202, 1
        %v204 = vadd.f32 %v202, %v203
        %v205 = vrsqrt.pop %v197
        %v206 = vmul.f32 %v205, %v197
        %v207 = vmul.f32 %v206, %v205
        %v208 = vmul.f32 0.5, %v207
        %v209 = vsub.f32 1.5, %v208
        %v210 = vmul.f32 %v205, %v209
        %v211 = vmul.f32 %v197, %v210
        %vm212 = vcmp.eq.f32.partialorder %v197, inf
        %v213 = vsel %vm212, %v197, %v211
        %vm214 = vcmp.eq.f32.partialorder %v197, 0.0
        %v215 = vand.u32 %v197, 2147483648
        %v216 = vsel %vm214, %v215, %v213
        %v217 = vrsqrt.pop %v204
        %v218 = vmul.f32 %v217, %v204
        %v219 = vmul.f32 %v218, %v217
        %v220 = vmul.f32 0.5, %v219
        %v221 = vsub.f32 1.5, %v220
        %v222 = vmul.f32 %v217, %v221
        %v223 = vmul.f32 %v204, %v222
        %vm224 = vcmp.eq.f32.partialorder %v204, inf
        %v225 = vsel %vm224, %v204, %v223
        %vm226 = vcmp.eq.f32.partialorder %v204, 0.0
        %v227 = vand.u32 %v204, 2147483648
        %v228 = vsel %vm226, %v227, %v225
        %v229 = vadd.f32 %v216, 1e-10
        %v230 = vadd.f32 %v228, 1e-10
        %v231 = vrcp.pop %v229
        %v232 = vrcp.pop %v230
        %v233 = vmul.f32 %v229, %v231
        %v234 = vmul.f32 %v230, %v232
        %v235 = vsub.f32 2.0, %v233
        %v236 = vsub.f32 2.0, %v234
        %v237 = vmul.f32 %v231, %v235
        %v238 = vmul.f32 %v232, %v236
        %v239 = vld [vmem:[%s1] sm:$0xf]
        %v242 = vrot.slane %v238, 4
        %v243 = vsel %vm190, %v237, %v242
        %v245 = vmul.f32 %v182, %v243
        %247 = vset.pattern.permute.xlu0 0
        %248 = vperm.xlu0 %247, %v239
        %v249 = vpop.permute.xlu0 %248
        %v251 = vunpack.c.l.s4 839922192
        %v252 = vunpack.c.0.s8 %v251
        %v253 = vperm.slane %v249, %v252
        %v255 = vmul.f32 %v245, %v253
        %256 = vst [vmem:[%s179] sm:$0xff] %v255
        %s257 = sand.u32 %s90, 1
        %s258 = scalar_lea.sflag [#allocation4], %s257
        %s259 = sand.u32 %s90, 1
        %s260 = smul.addr %s259, 8
        %s261 = scalar_lea.vmem [#allocation5], %s260
        // Predicated region
        $region33: #{tpu_custom_call.1} parent=27 // pred_check
          %p262 = pneg %p100
        $region34: #{tpu_custom_call.1} parent=27 // pred_check_branch
          %264 = sbr.rel (%p262) target = $region36
        $region35: #{tpu_custom_call.1} parent=27 // pred_region
          %s265 = smul.u32 2, %s24
          %267 = vsyncadd %s258, 0
          %s268 = smul.addr %s23, 2
          %s269 = sadd.s32 %s265, %s268
          %s270 = smul.addr %s269, 4
          %s271 = scalar_lea.hbm %s2, %s270
          %s273 = sshll.u32 %s261, 4
          %s274 = int_to_ptr.vmem [resolvable:$true] %s273
          %s275 = sshll.u32 %s271, 4
          %s276 = int_to_ptr.hbm [resolvable:$true] %s275
          %278 = dma.vmem_to_hbm [thread:$0]  %s274, 128, %s276, %s258
        $region36: #{tpu_custom_call.1} parent=27 // pred_fallthru
          _
      $region28: #{tpu_custom_call.1} parent=5 // pred_fallthru
        _
      %p279 = scmp.le.s32.totalorder 2, %s14
      // Predicated region
      $region37: #{tpu_custom_call.1} parent=5 // pred_check
        %p280 = pneg %p279
      $region38: #{tpu_custom_call.1} parent=5 // pred_check_branch
        %282 = sbr.rel (%p280) target = $region40
      $region39: #{tpu_custom_call.1} parent=5 // pred_region
        %s283 = ssub.s32 %s14, 2
        // Predicated region
        $region41: #{tpu_custom_call.1} parent=39 // pred_check
          %p284 = pneg %p106
        $region42: #{tpu_custom_call.1} parent=39 // pred_check_branch
          %286 = sbr.rel (%p284) target = $region44
        $region43: #{tpu_custom_call.1} parent=39 // pred_region
          %s287 = sand.u32 %s91, 1
          %s288 = scalar_lea.sflag [#allocation4], %s287
          %s289 = sand.u32 %s91, 1
          %s290 = smul.addr %s289, 8
          %s291 = scalar_lea.vmem [#allocation5], %s290
          %293 = dma.done %s288, 128
        $region44: #{tpu_custom_call.1} parent=39 // pred_fallthru
          _
      $region40: #{tpu_custom_call.1} parent=5 // pred_fallthru
        _
    $region6: #{tpu_custom_call.1} parent=1 // loop_footer
      %s18 = sadd.s32 1, %s14
    $region7: #{tpu_custom_call.1} parent=1 // loop_footer_branch
      %13 = sbr.rel target = $region3
    $region8: #{tpu_custom_call.1} parent=1 // loop_exit
      _
    %294 = vsyncpa [#allocation3], 1
    %s295 = scalar_lea.sflag [#allocation3], 1
    %296 = vsyncpa %s295, 1
    %297 = vsyncpa [#allocation4], 1
    %s298 = scalar_lea.sflag [#allocation4], 1
    %299 = vsyncpa %s298, 1

</llo_original>
